<compile_context>
chip_gen: v6e
topology: v6e:2x2x1
jax: 0.10.0
libtpu: 0.0.40
codegen_flags: <defaults>
</compile_context>

<pallas_src>
import jax
import jax.numpy as jnp
from jax import lax
from jax.experimental import pallas as pl
from jax.experimental.pallas import tpu as pltpu


_MiB = 1024 * 1024


def _vmem_limit_bytes():
    """Generation-aware VMEM limit (v7x: 64 MiB/TC, v5e/v6e: 128 MiB)."""
    cap = 64 * _MiB  # conservative default (v7x per-TC)
    try:
        info = pltpu.get_tpu_info()
        cap = int(getattr(info, "vmem_capacity_bytes", cap)) or cap
    except Exception:
        pass
    # Leave headroom for Mosaic internal scratch; never request more than 96 MiB.
    return max(32 * _MiB, min((cap * 3) // 4, 96 * _MiB))


def _pick_bb(batch, bytes_per_batch_elem, block_budget):
    """Pick the batch-block size: prefer >=4 grid steps (pipeline fill), an even
    step count (v7x megacore), then the largest block that fits the budget."""
    fits = [bb for bb in range(1, batch + 1)
            if batch % bb == 0 and bb * bytes_per_batch_elem <= block_budget]
    if not fits:
        return 1

    def key(bb):
        steps = batch // bb
        return (min(steps, 4), 1 if steps % 2 == 0 else 0, bb)

    return max(fits, key=key)


# ----------------------------------------------------------------------------
# Single-pass kernel: whole (BB, C, HW) slab per grid step.
# ----------------------------------------------------------------------------
def _make_single_pass_kernel(hw, bb):
    inv_hw = 1.0 / float(hw)

    def kernel(x_ref, w1t_ref, w2t_ref, o_ref):
        # x_ref : (BB, C, HW) native dtype (HW unpadded)
        # w1t_ref: (C, Cr) f32   (fc[0] weight, transposed)
        # w2t_ref: (Cr, C) f32   (fc[2] weight, transposed)
        x = x_ref[...]

        # AdaptiveAvgPool2d(1): f32 accumulation; AdaptiveMaxPool2d(1): native.
        avg_p = jnp.sum(x, axis=-1, dtype=jnp.float32) * inv_hw     # (BB, C)
        max_p = jnp.max(x, axis=-1).astype(jnp.float32)             # (BB, C)

        # Shared MLP (1x1 convs on 1x1 maps == matmuls), avg & max rows batched.
        pooled = jnp.concatenate([avg_p, max_p], axis=0)            # (2BB, C)
        h = jnp.maximum(
            jnp.dot(pooled, w1t_ref[...], preferred_element_type=jnp.float32),
            0.0)                                                     # (2BB, Cr)
        o = jnp.dot(h, w2t_ref[...], preferred_element_type=jnp.float32)  # (2BB, C)

        attn = jax.nn.sigmoid(o[:bb] + o[bb:])                       # (BB, C) f32
        # Scale in the native dtype (no full-tile f32 temp).
        o_ref[...] = attn.astype(o_ref.dtype)[:, :, None] * x

    return kernel


# ----------------------------------------------------------------------------
# Two-pass kernels (large per-batch slabs): pooling+MLP, then scale.
# ----------------------------------------------------------------------------
def _make_pool_mlp_kernel(hw, tile_hw, n_hw_tiles):
    has_tail = (hw % tile_hw) != 0
    inv_hw = 1.0 / float(hw)

    def kernel(x_ref, w1t_ref, w2t_ref, attn_ref, sum_sc, max_sc):
        t = pl.program_id(1)

        @pl.when(t == 0)
        def _():
            sum_sc[...] = jnp.zeros_like(sum_sc)
            max_sc[...] = jnp.full_like(max_sc, -jnp.inf)

        x = x_ref[...]                                               # (1, C, tile_hw)
        if has_tail:
            # Only the last HW tile has invalid (garbage-padded) lanes; mask
            # them: 0 for the sum, a copy of lane 0 (a valid element) for the
            # max (avoids needing a representable -inf in the native dtype).
            valid = hw - t * tile_hw
            lane = lax.broadcasted_iota(jnp.int32, x.shape, 2)
            mask = lane < valid
            x_sum = jnp.where(mask, x, jnp.zeros_like(x))
            x_max = jnp.where(mask, x, x[:, :, :1])
        else:
            x_sum = x
            x_max = x

        sum_sc[...] += jnp.sum(x_sum, axis=-1, dtype=jnp.float32)    # (1, C)
        max_sc[...] = jnp.maximum(max_sc[...],
                                  jnp.max(x_max, axis=-1).astype(jnp.float32))

        @pl.when(t == n_hw_tiles - 1)
        def _():
            avg_p = sum_sc[...] * inv_hw                             # (1, C)
            pooled = jnp.concatenate([avg_p, max_sc[...]], axis=0)   # (2, C)
            h = jnp.maximum(
                jnp.dot(pooled, w1t_ref[...],
                        preferred_element_type=jnp.float32), 0.0)    # (2, Cr)
            o = jnp.dot(h, w2t_ref[...],
                        preferred_element_type=jnp.float32)          # (2, C)
            attn = jax.nn.sigmoid(o[0:1] + o[1:2])                   # (1, C)
            attn_ref[...] = attn[:, :, None]                         # (1, C, 1)

    return kernel


def _scale_kernel(x_ref, attn_ref, o_ref):
    # x_ref: (1, C, tile_hw) native; attn_ref: (1, C, 1) f32.
    o_ref[...] = attn_ref[...].astype(o_ref.dtype) * x_ref[...]


# ----------------------------------------------------------------------------
# Wrapper
# ----------------------------------------------------------------------------
def channel_attention(x_nchw, w1, w2, *, force_two_pass=False, two_pass_tile_hw=None):
    """x_nchw: (B, C, H, W); w1: (Cr, C) fc[0] weight; w2: (C, Cr) fc[2] weight."""
    B, C, H, W = x_nchw.shape
    Cr = w1.shape[0]
    HW = H * W
    dtype = x_nchw.dtype
    itemsize = jnp.dtype(dtype).itemsize

    x = x_nchw.reshape(B, C, HW)                 # contiguous; free reshape
    # Transpose + cast weights once in the wrapper (not per grid step).
    w1t = w1.astype(jnp.float32).T               # (C, Cr)
    w2t = w2.astype(jnp.float32).T               # (Cr, C)
    weight_bytes = 2 * C * Cr * 4

    vmem_limit = _vmem_limit_bytes()
    slab_bytes = C * HW * itemsize
    # Single-pass uses ~4x the block (double-buffered input AND output) + weights.
    max_single_slab = max(0, (vmem_limit - weight_bytes - 2 * _MiB) // 4)

    mlp_flops = 8 * B * C * Cr                   # two (2B,C)x(C,Cr)-class matmuls

    single_pass = (not force_two_pass) and (slab_bytes <= max_single_slab)
    if single_pass and B == 1 and slab_bytes > 4 * _MiB:
        single_pass = False  # one giant unpipelined step; prefer HW-tiled two-pass

    if single_pass:
        block_budget = min(4 * _MiB, max_single_slab)
        BB = _pick_bb(B, slab_bytes, block_budget)
        grid = (B // BB,)
        kernel = _make_single_pass_kernel(HW, BB)

        cost = pl.CostEstimate(
            flops=int(3 * B * C * HW + mlp_flops),      # sum + max + scale
            transcendentals=int(B * C),
            bytes_accessed=int(2 * B * C * HW * itemsize + weight_bytes),
        )

        out = pl.pallas_call(
            kernel,
            out_shape=jax.ShapeDtypeStruct((B, C, HW), dtype),
            grid_spec=pltpu.PrefetchScalarGridSpec(
                num_scalar_prefetch=0,
                grid=grid,
                in_specs=[
                    pl.BlockSpec((BB, C, HW), lambda b: (b, 0, 0)),
                    pl.BlockSpec((C, Cr), lambda b: (0, 0)),
                    pl.BlockSpec((Cr, C), lambda b: (0, 0)),
                ],
                out_specs=pl.BlockSpec((BB, C, HW), lambda b: (b, 0, 0)),
            ),
            compiler_params=pltpu.CompilerParams(
                dimension_semantics=("parallel",),
                vmem_limit_bytes=vmem_limit,
            ),
            cost_estimate=cost,
        )(x, w1t, w2t)
        return out.reshape(B, C, H, W)

    # ---- two-pass path: HW-tiled pooling + MLP, then HW-tiled scale ----
    if two_pass_tile_hw is None:
        target = 2 * _MiB
        tile_hw = max(128, (target // max(1, C * itemsize)) // 128 * 128)
    else:
        tile_hw = int(two_pass_tile_hw)
    tile_hw = min(tile_hw, pl.cdiv(HW, 128) * 128)
    n_hw_tiles = pl.cdiv(HW, tile_hw)

    pool_kernel = _make_pool_mlp_kernel(HW, tile_hw, n_hw_tiles)
    cost1 = pl.CostEstimate(
        flops=int(2 * B * C * HW + mlp_flops),
        transcendentals=int(B * C),
        bytes_accessed=int(B * C * HW * itemsize + weight_bytes + B * C * 4),
    )
    attn = pl.pallas_call(
        pool_kernel,
        out_shape=jax.ShapeDtypeStruct((B, C, 1), jnp.float32),
        grid_spec=pltpu.PrefetchScalarGridSpec(
            num_scalar_prefetch=0,
            grid=(B, n_hw_tiles),
            in_specs=[
                pl.BlockSpec((1, C, tile_hw), lambda b, t: (b, 0, t)),
                pl.BlockSpec((C, Cr), lambda b, t: (0, 0)),
                pl.BlockSpec((Cr, C), lambda b, t: (0, 0)),
            ],
            out_specs=pl.BlockSpec((1, C, 1), lambda b, t: (b, 0, 0)),
            scratch_shapes=[pltpu.VMEM((1, C), jnp.float32),
                            pltpu.VMEM((1, C), jnp.float32)],
        ),
        compiler_params=pltpu.CompilerParams(
            dimension_semantics=("parallel", "arbitrary"),
            vmem_limit_bytes=vmem_limit,
        ),
        cost_estimate=cost1,
    )(x, w1t, w2t)

    cost2 = pl.CostEstimate(
        flops=int(B * C * HW),
        transcendentals=0,
        bytes_accessed=int(2 * B * C * HW * itemsize + B * C * 4),
    )
    out = pl.pallas_call(
        _scale_kernel,
        out_shape=jax.ShapeDtypeStruct((B, C, HW), dtype),
        grid_spec=pltpu.PrefetchScalarGridSpec(
            num_scalar_prefetch=0,
            grid=(B, n_hw_tiles),
            in_specs=[
                pl.BlockSpec((1, C, tile_hw), lambda b, t: (b, 0, t)),
                pl.BlockSpec((1, C, 1), lambda b, t: (b, 0, 0)),
            ],
            out_specs=pl.BlockSpec((1, C, tile_hw), lambda b, t: (b, 0, t)),
        ),
        compiler_params=pltpu.CompilerParams(
            dimension_semantics=("parallel", "parallel"),
            vmem_limit_bytes=vmem_limit,
        ),
        cost_estimate=cost2,
    )(x, attn)
    return out.reshape(B, C, H, W)


# ----------------------------------------------------------------------------
# Helpers / reference
# ----------------------------------------------------------------------------
def make_weights(key, in_planes, ratio):
    """Deterministic init matching PyTorch Conv2d defaults (kaiming-uniform-ish)."""
    hidden = in_planes // ratio
    k1, k2 = jax.random.split(key)
    bound1 = 1.0 / (in_planes ** 0.5)
    w1 = jax.random.uniform(k1, (hidden, in_planes), jnp.float32, -bound1, bound1)
    bound2 = 1.0 / (hidden ** 0.5)
    w2 = jax.random.uniform(k2, (in_planes, hidden), jnp.float32, -bound2, bound2)
    return w1, w2


def channel_attention_ref(x, w1, w2):
    """Pure-JAX reference for verification."""
    avg_p = jnp.mean(x, axis=(2, 3))                      # (B, C)
    max_p = jnp.max(x, axis=(2, 3))                       # (B, C)

    def fc(p):                                            # p: (B, C)
        h = jnp.maximum(p @ w1.T, 0.0)                    # (B, Cr)
        return h @ w2.T                                   # (B, C)

    attn = jax.nn.sigmoid(fc(avg_p) + fc(max_p))          # (B, C)
    return attn[:, :, None, None] * x


if __name__ == "__main__":
    key = jax.random.PRNGKey(0)
    kx1, kx2, kx3, kw = jax.random.split(key, 4)

    B, C, ratio = 2, 32, 4
    w1, w2 = make_weights(kw, C, ratio)

    # Case 1: HW multiple of 128 (single-pass, fully unmasked stores).
    x1 = jax.random.normal(kx1, (B, C, 16, 16), dtype=jnp.float32)
    out1 = jax.block_until_ready(channel_attention(x1, w1, w2))
    ref1 = channel_attention_ref(x1, w1, w2)
    assert out1.shape == x1.shape
    assert jnp.allclose(out1, ref1, atol=1e-5, rtol=1e-5), "mismatch (single-pass, aligned)"

    # Case 2: HW = 49 (not a multiple of 128) -- unpadded single-pass path.
    x2 = jax.random.normal(kx2, (B, C, 7, 7), dtype=jnp.float32)
    out2 = jax.block_until_ready(channel_attention(x2, w1, w2))
    ref2 = channel_attention_ref(x2, w1, w2)
    assert out2.shape == x2.shape
    assert jnp.allclose(out2, ref2, atol=1e-5, rtol=1e-5), "mismatch (single-pass, ragged)"

    # Case 3: forced two-pass path (multi-tile HW accumulation + masked tail).
    x3 = jax.random.normal(kx3, (B, C, 12, 12), dtype=jnp.float32)
    out3 = jax.block_until_ready(
        channel_attention(x3, w1, w2, force_two_pass=True, two_pass_tile_hw=128))
    ref3 = channel_attention_ref(x3, w1, w2)
    assert out3.shape == x3.shape
    assert jnp.allclose(out3, ref3, atol=1e-5, rtol=1e-5), "mismatch (two-pass)"

    print("KERNEL_OK")
</pallas_src>

<mosaic_0001>
module attributes {stable_mosaic.version = 11 : i64} {
  func.func @kernel(%arg0: i32, %arg1: memref<1x32x256xf32, #tpu.memory_space<vmem>>, %arg2: memref<32x8xf32, #tpu.memory_space<vmem>>, %arg3: memref<8x32xf32, #tpu.memory_space<vmem>>, %arg4: memref<1x32x256xf32, #tpu.memory_space<vmem>>) attributes {dimension_semantics = [#tpu.dimension_semantics<parallel>], iteration_bounds = array<i64: 2>, scalar_prefetch = 0 : i64, scratch_operands = 0 : i64, tpu.core_type = #tpu.core_type<tc>, window_params = [{transform_indices = @transform_0, window_bounds = array<i64: 1, 32, 256>}, {pipeline_mode = #tpu.pipeline_mode<synchronous>, transform_indices = @transform_1, window_bounds = array<i64: 32, 8>}, {pipeline_mode = #tpu.pipeline_mode<synchronous>, transform_indices = @transform_2, window_bounds = array<i64: 8, 32>}, {transform_indices = @transform_3, window_bounds = array<i64: 1, 32, 256>}]} {
    %c0 = arith.constant 0 : index
    %c0_0 = arith.constant 0 : index
    %c0_1 = arith.constant 0 : index
    %0 = vector.load %arg1[%c0, %c0_0, %c0_1] : memref<1x32x256xf32, #tpu.memory_space<vmem>>, vector<1x32x256xf32>
    %cst = arith.constant dense<0.000000e+00> : vector<1x32xf32>
    %1 = vector.multi_reduction <add>, %0, %cst [2] : vector<1x32x256xf32> to vector<1x32xf32>
    %cst_2 = arith.constant 3.906250e-03 : f32
    %2 = vector.broadcast %cst_2 : f32 to vector<1x32xf32>
    %3 = arith.mulf %1, %2 : vector<1x32xf32>
    %cst_3 = arith.constant dense<0xFF800000> : vector<1x32xf32>
    %4 = vector.multi_reduction <maximumf>, %0, %cst_3 [2] : vector<1x32x256xf32> to vector<1x32xf32>
    %5 = tpu.concatenate %3, %4 in 0 : vector<1x32xf32>, vector<1x32xf32> -> vector<2x32xf32>
    %c0_4 = arith.constant 0 : index
    %c0_5 = arith.constant 0 : index
    %6 = vector.load %arg2[%c0_4, %c0_5] : memref<32x8xf32, #tpu.memory_space<vmem>>, vector<32x8xf32>
    %cst_6 = arith.constant dense<0.000000e+00> : vector<2x8xf32>
    %7 = tpu.matmul %5, %6, %cst_6 {dimension_numbers = #tpu.dot_dimension_numbers<[1], [0], [0], [1], [0, 0, 1, 1], [], []>} : vector<2x32xf32>, vector<32x8xf32>, vector<2x8xf32> -> vector<2x8xf32>
    %cst_7 = arith.constant 0.000000e+00 : f32
    %8 = vector.broadcast %cst_7 : f32 to vector<2x8xf32>
    %9 = arith.maximumf %7, %8 : vector<2x8xf32>
    %c0_8 = arith.constant 0 : index
    %c0_9 = arith.constant 0 : index
    %10 = vector.load %arg3[%c0_8, %c0_9] : memref<8x32xf32, #tpu.memory_space<vmem>>, vector<8x32xf32>
    %cst_10 = arith.constant dense<0.000000e+00> : vector<2x32xf32>
    %11 = tpu.matmul %9, %10, %cst_10 {dimension_numbers = #tpu.dot_dimension_numbers<[1], [0], [0], [1], [0, 0, 1, 1], [], []>} : vector<2x8xf32>, vector<8x32xf32>, vector<2x32xf32> -> vector<2x32xf32>
    %12 = vector.extract_strided_slice %11 {offsets = [0, 0], sizes = [1, 32], strides = [1, 1]} : vector<2x32xf32> to vector<1x32xf32>
    %13 = vector.extract_strided_slice %11 {offsets = [1, 0], sizes = [1, 32], strides = [1, 1]} : vector<2x32xf32> to vector<1x32xf32>
    %14 = arith.addf %12, %13 : vector<1x32xf32>
    %15 = arith.negf %14 : vector<1x32xf32>
    %16 = math.exp %15 : vector<1x32xf32>
    %cst_11 = arith.constant 1.000000e+00 : f32
    %17 = vector.broadcast %cst_11 : f32 to vector<1x32xf32>
    %18 = arith.addf %17, %16 : vector<1x32xf32>
    %19 = arith.divf %17, %18 : vector<1x32xf32>
    %20 = vector.shape_cast %19 : vector<1x32xf32> to vector<1x32x1xf32>
    %21 = vector.broadcast %20 : vector<1x32x1xf32> to vector<1x32x256xf32>
    %22 = arith.mulf %21, %0 : vector<1x32x256xf32>
    %c0_12 = arith.constant 0 : index
    %c0_13 = arith.constant 0 : index
    %c0_14 = arith.constant 0 : index
    %23 = vector.load %arg4[%c0_12, %c0_13, %c0_14] : memref<1x32x256xf32, #tpu.memory_space<vmem>>, vector<1x32x256xf32>
    tpu.vector_store %arg4[%c0_12, %c0_13, %c0_14], %22 {strides = array<i32>} : memref<1x32x256xf32, #tpu.memory_space<vmem>>, vector<1x32x256xf32>,
    return
  }
  func.func @transform_0(%arg0: i32) -> (i32, i32, i32) {
    %c0_i32 = arith.constant 0 : i32
    %c0_i32_0 = arith.constant 0 : i32
    %c0_i32_1 = arith.constant 0 : i32
    return %arg0, %c0_i32, %c0_i32_0 : i32, i32, i32
  }
  func.func @transform_1(%arg0: i32) -> (i32, i32) {
    %c0_i32 = arith.constant 0 : i32
    %c0_i32_0 = arith.constant 0 : i32
    %c0_i32_1 = arith.constant 0 : i32
    return %c0_i32, %c0_i32_0 : i32, i32
  }
  func.func @transform_2(%arg0: i32) -> (i32, i32) {
    %c0_i32 = arith.constant 0 : i32
    %c0_i32_0 = arith.constant 0 : i32
    %c0_i32_1 = arith.constant 0 : i32
    return %c0_i32, %c0_i32_0 : i32, i32
  }
  func.func @transform_3(%arg0: i32) -> (i32, i32, i32) {
    %c0_i32 = arith.constant 0 : i32
    %c0_i32_0 = arith.constant 0 : i32
    %c0_i32_1 = arith.constant 0 : i32
    return %arg0, %c0_i32, %c0_i32_0 : i32, i32, i32
  }
}

</mosaic_0001>

<llo_original>
// kernel: tpu_custom_call.1
$region0: #{tpu_custom_call.1}
  #allocation0 [shape = 'u32[]', space=smem, size = 0x4, offset = 0x4, fixed_abs, tag = 'smem constant byte address 0x4 - core index']
  #allocation1 [shape = 'u32[144,128]{1,0:T(1,128)}', space=vmem, size = 0x12000, scoped, tag = 'internal scratch']
  %s0 = inlined_call_operand.hbm [shape: f32[2,32,256], index: 0, kind: input, shape index: {}]
  %s1 = inlined_call_operand.vmem [shape: f32[32,8], index: 1, kind: input, shape index: {}]
  %s2 = inlined_call_operand.vmem [shape: f32[8,32], index: 2, kind: input, shape index: {}]
  %s3 = inlined_call_operand.hbm [shape: f32[2,32,256], index: 3, kind: output, shape index: {}]
  %s4 = sld [smem:[#allocation0]]
  $region49: #{tpu_custom_call.1} parent=0
    _
  %s6 = ssub.s32 1, %s4
  %s7 = scalar_select 0, %s6, %s4
  $region1: #{tpu_custom_call.1} parent=0
    #allocation2 [shape = 'u8[65536]{0}', space=vmem, size = 0x10000, scoped, tag = 'input window, operand 0']
    #allocation3 [shape = 's32[2]{0}', space=sflag, size = 0x8, scoped, tag = 'scoped memory for tpu_custom_call.1']
    #allocation4 [shape = 's32[2]{0}', space=sflag, size = 0x8, scoped, tag = 'scoped memory for tpu_custom_call.1']
    #allocation5 [shape = 'u8[65536]{0}', space=vmem, size = 0x10000, scoped, tag = 'output window, operand 0']
    %8 = vsyncpa [#allocation3], 0
    %s9 = scalar_lea.sflag [#allocation3], 1
    %10 = vsyncpa %s9, 0
    %11 = vsyncpa [#allocation4], 0
    %s12 = scalar_lea.sflag [#allocation4], 1
    %13 = vsyncpa %s12, 0
    loop: start=0, step=1, limit=4
    $region2: #{tpu_custom_call.1} parent=1 // loop_pre_header
      _
    $region3: #{tpu_custom_call.1} parent=1 // loop_header
      %s15 = sphi 0, %s19
      %p16 = scmp.ge.s32.totalorder %s15, 4
      %s25 = sphi 0, %s27
      %s28 = sphi 0, %s25
      %s29 = sphi 0, %s28
      %s45 = sphi 0, %s29
      %s49 = sphi 0, %s49
      %s51 = sphi 0, %s49
      %s52 = sphi 0, %s51
      %s66 = sphi 0, %s52
      %s70 = sphi 0, %s70
      %s72 = sphi 0, %s70
      %s73 = sphi 0, %s72
      %s87 = sphi 0, %s73
      %s93 = sphi 0, %s95
      %s96 = sphi 0, %s93
      %s97 = sphi 0, %s96
      %s113 = sphi 0, %s97
    $region4: #{tpu_custom_call.1} parent=1 // loop_header_branch
      %18 = sbr.rel (%p16) target = $region8
    $region5: #{tpu_custom_call.1} parent=1 // loop_body
      %s20 = ssub.s32 %s15, 1
      %s21 = ssub.s32 %s15, 2
      %s22 = sadd.s32 %s15, 1
      %s23 = ssub.s32 %s15, %s22
      %p24 = scmp.eq.s32.totalorder %s23, 0
      %s26 = sadd.s32 %s25, 1
      %s27 = scalar_select %p24, %s25, %s26
      %p30 = pneg %p24
      %p31 = scmp.eq.s32.totalorder %s15, 1
      %p32 = por %p30, %p31
      %p33 = scmp.ne.s32.totalorder %s25, %s28
      %p34 = scmp.eq.s32.totalorder %s15, 0
      %p35 = por %p33, %p34
      %p36 = scmp.ne.s32.totalorder %s25, %s28
      %p37 = scmp.eq.s32.totalorder %s20, 1
      %p38 = por %p36, %p37
      %p39 = scmp.ne.s32.totalorder %s28, %s29
      %p40 = scmp.eq.s32.totalorder %s20, 0
      %p41 = por %p39, %p40
      %p42 = scmp.ne.s32.totalorder %s28, %s29
      %p43 = scmp.eq.s32.totalorder %s21, 1
      %p44 = por %p42, %p43
      %p46 = scmp.ne.s32.totalorder %s29, %s45
      %p47 = scmp.eq.s32.totalorder %s21, 0
      %p48 = por %p46, %p47
      %s50 = sadd.s32 %s49, 1
      %p53 = scmp.eq.s32.totalorder %s15, 1
      %p54 = scmp.ne.s32.totalorder %s49, %s51
      %p55 = scmp.eq.s32.totalorder %s15, 0
      %p56 = por %p54, %p55
      %p57 = scmp.ne.s32.totalorder %s49, %s51
      %p58 = scmp.eq.s32.totalorder %s20, 1
      %p59 = por %p57, %p58
      %p60 = scmp.ne.s32.totalorder %s51, %s52
      %p61 = scmp.eq.s32.totalorder %s20, 0
      %p62 = por %p60, %p61
      %p63 = scmp.ne.s32.totalorder %s51, %s52
      %p64 = scmp.eq.s32.totalorder %s21, 1
      %p65 = por %p63, %p64
      %p67 = scmp.ne.s32.totalorder %s52, %s66
      %p68 = scmp.eq.s32.totalorder %s21, 0
      %p69 = por %p67, %p68
      %s71 = sadd.s32 %s70, 1
      %p74 = scmp.eq.s32.totalorder %s15, 1
      %p75 = scmp.ne.s32.totalorder %s70, %s72
      %p76 = scmp.eq.s32.totalorder %s15, 0
      %p77 = por %p75, %p76
      %p78 = scmp.ne.s32.totalorder %s70, %s72
      %p79 = scmp.eq.s32.totalorder %s20, 1
      %p80 = por %p78, %p79
      %p81 = scmp.ne.s32.totalorder %s72, %s73
      %p82 = scmp.eq.s32.totalorder %s20, 0
      %p83 = por %p81, %p82
      %p84 = scmp.ne.s32.totalorder %s72, %s73
      %p85 = scmp.eq.s32.totalorder %s21, 1
      %p86 = por %p84, %p85
      %p88 = scmp.ne.s32.totalorder %s73, %s87
      %p89 = scmp.eq.s32.totalorder %s21, 0
      %p90 = por %p88, %p89
      %s91 = ssub.s32 %s15, %s22
      %p92 = scmp.eq.s32.totalorder %s91, 0
      %s94 = sadd.s32 %s93, 1
      %s95 = scalar_select %p92, %s93, %s94
      %p98 = pneg %p92
      %p99 = scmp.eq.s32.totalorder %s15, 1
      %p100 = por %p98, %p99
      %p101 = scmp.ne.s32.totalorder %s93, %s96
      %p102 = scmp.eq.s32.totalorder %s15, 0
      %p103 = por %p101, %p102
      %p104 = scmp.ne.s32.totalorder %s93, %s96
      %p105 = scmp.eq.s32.totalorder %s20, 1
      %p106 = por %p104, %p105
      %p107 = scmp.ne.s32.totalorder %s96, %s97
      %p108 = scmp.eq.s32.totalorder %s20, 0
      %p109 = por %p107, %p108
      %p110 = scmp.ne.s32.totalorder %s96, %s97
      %p111 = scmp.eq.s32.totalorder %s21, 1
      %p112 = por %p110, %p111
      %p114 = scmp.ne.s32.totalorder %s97, %s113
      %p115 = scmp.eq.s32.totalorder %s21, 0
      %p116 = por %p114, %p115
      %p117 = scmp.le.s32.totalorder 1, %s15
      %p118 = scmp.lt.s32.totalorder %s15, 3
      %p119 = pnand %p117, %p118
      %p120 = pneg %p119
      // Predicated region
      $region9: #{tpu_custom_call.1} parent=5 // pred_check
        _
      $region10: #{tpu_custom_call.1} parent=5 // pred_check_branch
        %122 = sbr.rel (%p119) target = $region12
      $region11: #{tpu_custom_call.1} parent=5 // pred_region
        %s123 = ssub.s32 %s15, 1
        // Predicated region
        $region13: #{tpu_custom_call.1} parent=11 // pred_check
          %p124 = pneg %p62
        $region14: #{tpu_custom_call.1} parent=11 // pred_check_branch
          %126 = sbr.rel (%p124) target = $region16
        $region15: #{tpu_custom_call.1} parent=11 // pred_region
          _
        $region16: #{tpu_custom_call.1} parent=11 // pred_fallthru
          _
        // Predicated region
        $region17: #{tpu_custom_call.1} parent=11 // pred_check
          %p127 = pneg %p83
        $region18: #{tpu_custom_call.1} parent=11 // pred_check_branch
          %129 = sbr.rel (%p127) target = $region20
        $region19: #{tpu_custom_call.1} parent=11 // pred_region
          _
        $region20: #{tpu_custom_call.1} parent=11 // pred_fallthru
          _
      $region12: #{tpu_custom_call.1} parent=5 // pred_fallthru
        _
      %p130 = scmp.lt.s32.totalorder %s15, 2
      // Predicated region
      $region21: #{tpu_custom_call.1} parent=5 // pred_check
        %p131 = pneg %p130
      $region22: #{tpu_custom_call.1} parent=5 // pred_check_branch
        %133 = sbr.rel (%p131) target = $region24
      $region23: #{tpu_custom_call.1} parent=5 // pred_region
        // Predicated region
        $region25: #{tpu_custom_call.1} parent=23 // pred_check
          %p134 = pneg %p35
        $region26: #{tpu_custom_call.1} parent=23 // pred_check_branch
          %136 = sbr.rel (%p134) target = $region28
        $region27: #{tpu_custom_call.1} parent=23 // pred_region
          %s137 = sand.u32 %s25, 1
          %s138 = scalar_lea.sflag [#allocation3], %s137
          %s139 = sand.u32 %s25, 1
          %s140 = smul.addr %s139, 64
          %s141 = scalar_lea.vmem [#allocation2], %s140
          %s143 = ssub.s32 1024, 1024
          %144 = vsyncadd %s138, %s143
          %s145 = smul.addr %s15, 8
          %s146 = smul.addr %s145, 128
          %s147 = scalar_lea.hbm %s0, %s146
          %s148 = sshll.u32 %s141, 4
          %s149 = int_to_ptr.vmem [resolvable:$true] %s148
          %154 = dma.hbm_to_vmem [thread:$0]  %s147, 1024, %s149, %s138, 256, 256, 16
        $region28: #{tpu_custom_call.1} parent=23 // pred_fallthru
          _
      $region24: #{tpu_custom_call.1} parent=5 // pred_fallthru
        _
      %p155 = scmp.le.s32.totalorder 1, %s15
      %p156 = scmp.lt.s32.totalorder %s15, 3
      %p157 = pnand %p155, %p156
      %p158 = pneg %p157
      // Predicated region
      $region29: #{tpu_custom_call.1} parent=5 // pred_check
        _
      $region30: #{tpu_custom_call.1} parent=5 // pred_check_branch
        %160 = sbr.rel (%p157) target = $region32
      $region31: #{tpu_custom_call.1} parent=5 // pred_region
        %s161 = ssub.s32 %s15, 1
        %s162 = sand.u32 %s28, 1
        %s163 = scalar_lea.sflag [#allocation3], %s162
        %s164 = sand.u32 %s28, 1
        %s165 = smul.addr %s164, 64
        %s166 = scalar_lea.vmem [#allocation2], %s165
        // Predicated region
        $region33: #{tpu_custom_call.1} parent=31 // pred_check
          %p167 = pneg %p41
        $region34: #{tpu_custom_call.1} parent=31 // pred_check_branch
          %169 = sbr.rel (%p167) target = $region36
        $region35: #{tpu_custom_call.1} parent=31 // pred_region
          %170 = dma.done %s163, 1024
        $region36: #{tpu_custom_call.1} parent=31 // pred_fallthru
          _
        %s171 = sand.u32 %s28, 1
        %s172 = scalar_lea.sflag [#allocation3], %s171
        %s173 = sand.u32 %s28, 1
        %s174 = smul.addr %s173, 64
        %s175 = scalar_lea.vmem [#allocation2], %s174
        %p176 = pneg %p41
        %p177 = pneg %p38
        %p178 = pneg %p62
        %p179 = pneg %p59
        %p180 = pneg %p83
        %p181 = pneg %p80
        %p182 = pneg %p109
        %p183 = pneg %p106
        %s184 = sand.u32 %s96, 1
        %s185 = scalar_lea.sflag [#allocation4], %s184
        %s186 = sand.u32 %s96, 1
        %s187 = smul.addr %s186, 64
        %s188 = scalar_lea.vmem [#allocation5], %s187
        %v189 = vld [vmem:[%s166] sm:$0xff]
        %v190 = vld [vmem:[%s166 + $0x8] sm:$0xff]
        %v191 = vld [vmem:[%s166 + $0x10] sm:$0xff]
        %v192 = vld [vmem:[%s166 + $0x18] sm:$0xff]
        %v193 = vld [vmem:[%s166 + $0x20] sm:$0xff]
        %v194 = vld [vmem:[%s166 + $0x28] sm:$0xff]
        %v195 = vld [vmem:[%s166 + $0x30] sm:$0xff]
        %v196 = vld [vmem:[%s166 + $0x38] sm:$0xff]
        %v197 = vadd.f32 %v189, %v190
        %198 = vadd.xlane.f32.xlu0 %v197
        %v199 = vpop.xlane.xlu0 %198
        %v200 = vadd.f32 %v191, %v192
        %201 = vadd.xlane.f32.xlu0 %v200
        %v202 = vpop.xlane.xlu0 %201
        %v203 = vadd.f32 %v193, %v194
        %204 = vadd.xlane.f32.xlu0 %v203
        %v205 = vpop.xlane.xlu0 %204
        %v206 = vadd.f32 %v195, %v196
        %207 = vadd.xlane.f32.xlu0 %v206
        %v208 = vpop.xlane.xlu0 %207
        %v209 = vmul.f32 %v199, 0.00390625
        %v210 = vmul.f32 %v202, 0.00390625
        %v211 = vmul.f32 %v205, 0.00390625
        %v212 = vmul.f32 %v208, 0.00390625
        %v213 = vmax.f32 %v189, %v190
        %214 = vmax.xlane.f32.xlu0 %v213
        %v215 = vpop.xlane.xlu0 %214
        %v216 = vmax.f32 %v191, %v192
        %217 = vmax.xlane.f32.xlu0 %v216
        %v218 = vpop.xlane.xlu0 %217
        %v219 = vmax.f32 %v193, %v194
        %220 = vmax.xlane.f32.xlu0 %v219
        %v221 = vpop.xlane.xlu0 %220
        %v222 = vmax.f32 %v195, %v196
        %223 = vmax.xlane.f32.xlu0 %v222
        %v224 = vpop.xlane.xlu0 %223
        %v229 = vlaneseq
        %v230 = vand.u32 %v229, 127
        %v231 = vlaneseq
        %v232 = vshrl.u32 %v231, 7
        %v233 = vsub.s32 %v230, %v232
        %v234 = vrot.slane %v209, %v233
        %v235 = vadd.s32 %v230, 4294967288
        %v236 = vlaneseq
        %v237 = vshrl.u32 %v236, 7
        %v238 = vsub.s32 %v235, %v237
        %v239 = vrot.slane %v210, %v238
        %vm240 = vcmask 130112
        %v241 = vsel %vm240, %v239, %v234
        %v242 = vadd.s32 %v230, 4294967280
        %v243 = vlaneseq
        %v244 = vshrl.u32 %v243, 7
        %v245 = vsub.s32 %v242, %v244
        %v246 = vrot.slane %v211, %v245
        %vm247 = vcmask 195712
        %v248 = vsel %vm247, %v246, %v241
        %v249 = vadd.s32 %v230, 4294967272
        %v250 = vlaneseq
        %v251 = vshrl.u32 %v250, 7
        %v252 = vsub.s32 %v249, %v251
        %v253 = vrot.slane %v212, %v252
        %vm254 = vcmask 261312
        %v255 = vsel %vm254, %v253, %v248
        %v261 = vlaneseq
        %v262 = vshrl.u32 %v261, 7
        %v263 = vsub.s32 %v230, %v262
        %v264 = vrot.slane %v215, %v263
        %v265 = vlaneseq
        %v266 = vshrl.u32 %v265, 7
        %v267 = vsub.s32 %v235, %v266
        %v268 = vrot.slane %v218, %v267
        %v269 = vsel %vm240, %v268, %v264
        %v270 = vlaneseq
        %v271 = vshrl.u32 %v270, 7
        %v272 = vsub.s32 %v242, %v271
        %v273 = vrot.slane %v221, %v272
        %v274 = vsel %vm247, %v273, %v269
        %v275 = vlaneseq
        %v276 = vshrl.u32 %v275, 7
        %v277 = vsub.s32 %v249, %v276
        %v278 = vrot.slane %v224, %v277
        %v279 = vsel %vm254, %v278, %v274
        %vm281 = vcmask 1040384
        %v282 = vsel %vm281, %v255, %v279
        %v283 = vld [vmem:[%s1] sm:$0xff]
        %v284 = vld [vmem:[%s1 + $0x8] sm:$0xff]
        %v285 = vld [vmem:[%s1 + $0x10] sm:$0xff]
        %v286 = vld [vmem:[%s1 + $0x18] sm:$0xff]
        %vm287 = vcmask 261120
        %v289 = vsel %vm287, %v282, 0
        %291 = vmatprep.subr.mxu0 0.0
        %292 = vmatpush1.msra.mxu0 0.0
        %293 = vmatprep.subr.mxu0 0.0
        %294 = vmatpush1.msra.mxu0 0.0
        %295 = vmatprep.subr.mxu0 0.0
        %296 = vmatpush1.msra.mxu0 0.0
        %297 = vmatprep.subr.mxu0 0.0
        %298 = vmatpush1.msra.mxu0 0.0
        %299 = vmatprep.subr.mxu0 0.0
        %300 = vmatpush1.msra.mxu0 0.0
        %301 = vmatprep.subr.mxu0 0.0
        %302 = vmatpush1.msra.mxu0 0.0
        %303 = vmatprep.subr.mxu0 0.0
        %304 = vmatpush1.msra.mxu0 0.0
        %305 = vmatprep.subr.mxu0 0.0
        %306 = vmatpush1.msra.mxu0 0.0
        %307 = vmatprep.subr.mxu0 0.0
        %308 = vmatpush1.msra.mxu0 0.0
        %309 = vmatprep.subr.mxu0 0.0
        %310 = vmatpush1.msra.mxu0 0.0
        %311 = vmatprep.subr.mxu0 0.0
        %312 = vmatpush1.msra.mxu0 0.0
        %313 = vmatprep.subr.mxu0 0.0
        %314 = vmatpush1.msra.mxu0 0.0
        %315 = vmatprep.subr.mxu0 0.0
        %316 = vmatpush1.msra.mxu0 %v286
        %317 = vmatprep.subr.mxu0 0.0
        %318 = vmatpush1.msra.mxu0 %v285
        %319 = vmatprep.subr.mxu0 0.0
        %320 = vmatpush1.msra.mxu0 %v284
        %321 = vmatprep.subr.mxu0 0.0
        %322 = vmatpush1.msra.mxu0 %v283
        %323 = vmatprep.subr.mxu0 0.0
        %324 = vmatpush2.msra.mxu0 0.0
        %325 = vmatprep.subr.mxu0 0.0
        %326 = vmatpush2.msra.mxu0 0.0
        %327 = vmatprep.subr.mxu0 0.0
        %328 = vmatpush2.msra.mxu0 0.0
        %329 = vmatprep.subr.mxu0 0.0
        %330 = vmatpush2.msra.mxu0 0.0
        %331 = vmatprep.subr.mxu0 0.0
        %332 = vmatpush2.msra.mxu0 0.0
        %333 = vmatprep.subr.mxu0 0.0
        %334 = vmatpush2.msra.mxu0 0.0
        %335 = vmatprep.subr.mxu0 0.0
        %336 = vmatpush2.msra.mxu0 0.0
        %337 = vmatprep.subr.mxu0 0.0
        %338 = vmatpush2.msra.mxu0 0.0
        %339 = vmatprep.subr.mxu0 0.0
        %340 = vmatpush2.msra.mxu0 0.0
        %341 = vmatprep.subr.mxu0 0.0
        %342 = vmatpush2.msra.mxu0 0.0
        %343 = vmatprep.subr.mxu0 0.0
        %344 = vmatpush2.msra.mxu0 0.0
        %345 = vmatprep.subr.mxu0 0.0
        %346 = vmatpush2.msra.mxu0 0.0
        %347 = vmatprep.subr.mxu0 0.0
        %348 = vmatpush2.msra.mxu0 0.0
        %349 = vmatprep.subr.mxu0 0.0
        %350 = vmatpush2.msra.mxu0 0.0
        %351 = vmatprep.subr.mxu0 0.0
        %352 = vmatpush2.msra.mxu0 0.0
        %353 = vmatprep.subr.mxu0 0.0
        %354 = vmatpush2.msra.mxu0 0.0
        %355 = vmatprep.mubr.f32.mxu0 0.0
        %356 = vmatmul.mubr.f32.gmra.mxu0 %v289
        %v357 = vpop.f32.mrf.mxu0
        %v358 = vadd.f32 0.0, %v357
        %v359 = vpop.f32.mrf.mxu0
        %360 = vdwg.mxu0
        %v361 = vmax.f32 %v358, 0.0
        %v362 = vld [vmem:[%s2] sm:$0xff]
        %vm363 = vcmask 64512
        %v365 = vsel %vm363, %v361, 0
        %367 = vmatprep.subr.mxu0 0.0
        %368 = vmatpush1.msra.mxu0 0.0
        %369 = vmatprep.subr.mxu0 0.0
        %370 = vmatpush1.msra.mxu0 0.0
        %371 = vmatprep.subr.mxu0 0.0
        %372 = vmatpush1.msra.mxu0 0.0
        %373 = vmatprep.subr.mxu0 0.0
        %374 = vmatpush1.msra.mxu0 0.0
        %375 = vmatprep.subr.mxu0 0.0
        %376 = vmatpush1.msra.mxu0 0.0
        %377 = vmatprep.subr.mxu0 0.0
        %378 = vmatpush1.msra.mxu0 0.0
        %379 = vmatprep.subr.mxu0 0.0
        %380 = vmatpush1.msra.mxu0 0.0
        %381 = vmatprep.subr.mxu0 0.0
        %382 = vmatpush1.msra.mxu0 0.0
        %383 = vmatprep.subr.mxu0 0.0
        %384 = vmatpush1.msra.mxu0 0.0
        %385 = vmatprep.subr.mxu0 0.0
        %386 = vmatpush1.msra.mxu0 0.0
        %387 = vmatprep.subr.mxu0 0.0
        %388 = vmatpush1.msra.mxu0 0.0
        %389 = vmatprep.subr.mxu0 0.0
        %390 = vmatpush1.msra.mxu0 0.0
        %391 = vmatprep.subr.mxu0 0.0
        %392 = vmatpush1.msra.mxu0 0.0
        %393 = vmatprep.subr.mxu0 0.0
        %394 = vmatpush1.msra.mxu0 0.0
        %395 = vmatprep.subr.mxu0 0.0
        %396 = vmatpush1.msra.mxu0 0.0
        %397 = vmatprep.subr.mxu0 0.0
        %398 = vmatpush1.msra.mxu0 %v362
        %399 = vmatprep.subr.mxu0 0.0
        %400 = vmatpush2.msra.mxu0 0.0
        %401 = vmatprep.subr.mxu0 0.0
        %402 = vmatpush2.msra.mxu0 0.0
        %403 = vmatprep.subr.mxu0 0.0
        %404 = vmatpush2.msra.mxu0 0.0
        %405 = vmatprep.subr.mxu0 0.0
        %406 = vmatpush2.msra.mxu0 0.0
        %407 = vmatprep.subr.mxu0 0.0
        %408 = vmatpush2.msra.mxu0 0.0
        %409 = vmatprep.subr.mxu0 0.0
        %410 = vmatpush2.msra.mxu0 0.0
        %411 = vmatprep.subr.mxu0 0.0
        %412 = vmatpush2.msra.mxu0 0.0
        %413 = vmatprep.subr.mxu0 0.0
        %414 = vmatpush2.msra.mxu0 0.0
        %415 = vmatprep.subr.mxu0 0.0
        %416 = vmatpush2.msra.mxu0 0.0
        %417 = vmatprep.subr.mxu0 0.0
        %418 = vmatpush2.msra.mxu0 0.0
        %419 = vmatprep.subr.mxu0 0.0
        %420 = vmatpush2.msra.mxu0 0.0
        %421 = vmatprep.subr.mxu0 0.0
        %422 = vmatpush2.msra.mxu0 0.0
        %423 = vmatprep.subr.mxu0 0.0
        %424 = vmatpush2.msra.mxu0 0.0
        %425 = vmatprep.subr.mxu0 0.0
        %426 = vmatpush2.msra.mxu0 0.0
        %427 = vmatprep.subr.mxu0 0.0
        %428 = vmatpush2.msra.mxu0 0.0
        %429 = vmatprep.subr.mxu0 0.0
        %430 = vmatpush2.msra.mxu0 0.0
        %431 = vmatprep.mubr.f32.mxu0 0.0
        %432 = vmatmul.mubr.f32.gmra.mxu0 %v365
        %v433 = vpop.f32.mrf.mxu0
        %v434 = vadd.f32 0.0, %v433
        %v435 = vpop.f32.mrf.mxu0
        %436 = vdwg.mxu0
        %v438 = vrot.slane %v434, 1
        %v440 = vadd.f32 %v434, %v438
        %v441 = vxor.u32 %v440, 2147483648
        %v442 = vmul.f32 %v441, 1.442695
        %v443 = vpow.pop %v442
        %v444 = vadd.f32 %v443, 1.0
        %v445 = vrcp.pop %v444
        %v446 = vmul.f32 1.0, %v445
        %v447 = vlaneseq
        %v448 = vshrl.u32 %v447, 7
        %v449 = vsub.s32 0, %v448
        %v450 = vrot.slane %v446, %v449
        %452 = vbcast.lane.b32.xlu0 %v450, 256
        %v453 = vpop.permute.xlu0 %452
        %s455 = sor.u32 256, 8
        %456 = vbcast.lane.b32.xlu0 %v450, %s455
        %v457 = vpop.permute.xlu0 %456
        %s459 = sor.u32 256, 16
        %460 = vbcast.lane.b32.xlu0 %v450, %s459
        %v461 = vpop.permute.xlu0 %460
        %s463 = sor.u32 256, 24
        %464 = vbcast.lane.b32.xlu0 %v450, %s463
        %v465 = vpop.permute.xlu0 %464
        %v466 = vmul.f32 %v453, %v189
        %v467 = vmul.f32 %v453, %v190
        %v468 = vmul.f32 %v457, %v191
        %v469 = vmul.f32 %v457, %v192
        %v470 = vmul.f32 %v461, %v193
        %v471 = vmul.f32 %v461, %v194
        %v472 = vmul.f32 %v465, %v195
        %v473 = vmul.f32 %v465, %v196
        %474 = vst [vmem:[%s188] sm:$0xff] %v466
        %475 = vst [vmem:[%s188 + $0x8] sm:$0xff] %v467
        %476 = vst [vmem:[%s188 + $0x10] sm:$0xff] %v468
        %477 = vst [vmem:[%s188 + $0x18] sm:$0xff] %v469
        %478 = vst [vmem:[%s188 + $0x20] sm:$0xff] %v470
        %479 = vst [vmem:[%s188 + $0x28] sm:$0xff] %v471
        %480 = vst [vmem:[%s188 + $0x30] sm:$0xff] %v472
        %481 = vst [vmem:[%s188 + $0x38] sm:$0xff] %v473
        %s482 = sand.u32 %s96, 1
        %s483 = scalar_lea.sflag [#allocation4], %s482
        %s484 = sand.u32 %s96, 1
        %s485 = smul.addr %s484, 64
        %s486 = scalar_lea.vmem [#allocation5], %s485
        // Predicated region
        $region37: #{tpu_custom_call.1} parent=31 // pred_check
          %p487 = pneg %p106
        $region38: #{tpu_custom_call.1} parent=31 // pred_check_branch
          %489 = sbr.rel (%p487) target = $region40
        $region39: #{tpu_custom_call.1} parent=31 // pred_region
          %s491 = ssub.s32 1024, 1024
          %492 = vsyncadd %s483, %s491
          %s493 = smul.addr %s20, 8
          %s494 = smul.addr %s493, 128
          %s495 = scalar_lea.hbm %s3, %s494
          %s496 = sshll.u32 %s486, 4
          %s497 = int_to_ptr.vmem [resolvable:$true] %s496
          %502 = dma.vmem_to_hbm [thread:$0]  %s497, 1024, %s495, %s483, 256, 256, 16
        $region40: #{tpu_custom_call.1} parent=31 // pred_fallthru
          _
      $region32: #{tpu_custom_call.1} parent=5 // pred_fallthru
        _
      %p503 = scmp.le.s32.totalorder 2, %s15
      // Predicated region
      $region41: #{tpu_custom_call.1} parent=5 // pred_check
        %p504 = pneg %p503
      $region42: #{tpu_custom_call.1} parent=5 // pred_check_branch
        %506 = sbr.rel (%p504) target = $region44
      $region43: #{tpu_custom_call.1} parent=5 // pred_region
        %s507 = ssub.s32 %s15, 2
        // Predicated region
        $region45: #{tpu_custom_call.1} parent=43 // pred_check
          %p508 = pneg %p112
        $region46: #{tpu_custom_call.1} parent=43 // pred_check_branch
          %510 = sbr.rel (%p508) target = $region48
        $region47: #{tpu_custom_call.1} parent=43 // pred_region
          %s511 = sand.u32 %s97, 1
          %s512 = scalar_lea.sflag [#allocation4], %s511
          %s513 = sand.u32 %s97, 1
          %s514 = smul.addr %s513, 64
          %s515 = scalar_lea.vmem [#allocation5], %s514
          %516 = dma.done %s512, 1024
        $region48: #{tpu_custom_call.1} parent=43 // pred_fallthru
          _
      $region44: #{tpu_custom_call.1} parent=5 // pred_fallthru
        _
    $region6: #{tpu_custom_call.1} parent=1 // loop_footer
      %s19 = sadd.s32 1, %s15
    $region7: #{tpu_custom_call.1} parent=1 // loop_footer_branch
      %14 = sbr.rel target = $region3
    $region8: #{tpu_custom_call.1} parent=1 // loop_exit
      _
    %517 = vsyncpa [#allocation3], 1
    %s518 = scalar_lea.sflag [#allocation3], 1
    %519 = vsyncpa %s518, 1
    %520 = vsyncpa [#allocation4], 1
    %s521 = scalar_lea.sflag [#allocation4], 1
    %522 = vsyncpa %s521, 1

</llo_original>
